<compile_context>
chip_gen: v6e
topology: v6e:2x2x1
jax: 0.10.0
libtpu: 0.0.40
codegen_flags: <defaults>
</compile_context>

<pallas_src>
import jax
import jax.numpy as jnp
from jax.experimental import pallas as pl
from jax.experimental.pallas import tpu as pltpu


def _round_up(x: int, m: int) -> int:
    return ((x + m - 1) // m) * m


def _discri_kernel(x_ref, w1_ref, b1_ref, w2_ref, b2_ref, o_ref):
    # fc1: [tb, d1] @ [d1, d2]  (MXU, f32 accumulate) + bias, ReLU (f32 VPU)
    h = jnp.dot(x_ref[...], w1_ref[...], preferred_element_type=jnp.float32)
    h = jnp.maximum(h + b1_ref[...].astype(jnp.float32), 0.0)
    # dropout(p=0.25) in eval/inference mode == identity
    # TODO(synk): training-mode stochastic dropout (pltpu.prng_random_bits + 1/(1-p) scale) not emitted.
    # fc2: [tb, d2] @ [d2, t] + bias
    out = jnp.dot(h.astype(w2_ref.dtype), w2_ref[...],
                  preferred_element_type=jnp.float32) + b2_ref[...].astype(jnp.float32)
    o_ref[...] = out.astype(o_ref.dtype)


def _batch_tiling(batch: int, tile_b: int, sublane: int, min_tiles: int = 2):
    """Choose (padded_batch, tile_batch, n_tiles).

    Tiles are <= tile_b, a multiple of `sublane`, and near-equal in size so the
    tail padding is < sublane rows instead of up to tile_b-1.  When there is
    enough work we force >= min_tiles tiles so both v7x TensorCores get a tile
    (harmless on the single sequential TC of v5e/v6e)."""
    b = _round_up(max(batch, 1), sublane)
    n = pl.cdiv(b, tile_b)
    if b >= 2 * sublane * min_tiles:
        n = max(n, min_tiles)
    tb = _round_up(pl.cdiv(b, n), sublane)
    n = pl.cdiv(b, tb)
    return n * tb, tb, n


def discri_forward(x, w1, b1, w2, b2, *, tile_b: int = 2048):
    """x: [B, dense1]; w1: [dense1, dense2]; b1: [1, dense2];
       w2: [dense2, target]; b2: [1, target]  ->  [B, target]

    Feature dims stay UNPADDED in HBM (BlockSpec dims equal the full array
    dims); only the batch dim is padded/tiled."""
    B, d1 = x.shape
    d2 = w1.shape[1]
    t = w2.shape[1]

    # Sublane packing depends on dtype width (f32: 8, bf16: 16, int8/fp8: 32).
    itemsize = jnp.dtype(x.dtype).itemsize
    sublane = max(8, 32 // max(itemsize, 1))

    bp, tb, n_tiles = _batch_tiling(B, tile_b, sublane)
    if bp != B:
        x = jnp.pad(x, ((0, bp - B), (0, 0)))  # zero rows, sliced off below

    out = pl.pallas_call(
        _discri_kernel,
        out_shape=jax.ShapeDtypeStruct((bp, t), x.dtype),
        grid_spec=pltpu.PrefetchScalarGridSpec(
            num_scalar_prefetch=0,
            grid=(n_tiles,),
            in_specs=[
                pl.BlockSpec((tb, d1), lambda i: (i, 0)),   # x: per-batch tile (unpadded lanes)
                pl.BlockSpec((d1, d2), lambda i: (0, 0)),   # w1: VMEM-resident
                pl.BlockSpec((1, d2), lambda i: (0, 0)),    # b1: VMEM-resident
                pl.BlockSpec((d2, t), lambda i: (0, 0)),    # w2: VMEM-resident
                pl.BlockSpec((1, t), lambda i: (0, 0)),     # b2: VMEM-resident
            ],
            out_specs=pl.BlockSpec((tb, t), lambda i: (i, 0)),  # slim (tb, t) write
        ),
        compiler_params=pltpu.CompilerParams(
            dimension_semantics=("parallel",),
            vmem_limit_bytes=32 * 1024 * 1024,
        ),
    )(x, w1, b1, w2, b2)

    return out[:B] if bp != B else out


def init_discri_params(key, dense1=10, dense2=10, target=2, dtype=jnp.float32):
    """Deterministic PyTorch-style Linear init: U(-1/sqrt(fan_in), 1/sqrt(fan_in))."""
    k1, k2, k3, k4 = jax.random.split(key, 4)
    bound1 = 1.0 / (dense1 ** 0.5)
    bound2 = 1.0 / (dense2 ** 0.5)
    # Stored pre-transposed: [in, out]  (PyTorch keeps [out, in]).
    w1 = jax.random.uniform(k1, (dense1, dense2), dtype, -bound1, bound1)
    b1 = jax.random.uniform(k2, (1, dense2), dtype, -bound1, bound1)
    w2 = jax.random.uniform(k3, (dense2, target), dtype, -bound2, bound2)
    b2 = jax.random.uniform(k4, (1, target), dtype, -bound2, bound2)
    return w1, b1, w2, b2


if __name__ == "__main__":
    key = jax.random.PRNGKey(0)
    kx, kp = jax.random.split(key)

    dense1, dense2, target = 10, 10, 2
    batch = 8

    x = jax.random.normal(kx, (batch, dense1), jnp.float32)
    w1, b1, w2, b2 = init_discri_params(kp, dense1, dense2, target)

    out = jax.jit(discri_forward)(x, w1, b1, w2, b2)
    out = jax.block_until_ready(out)

    # Pure-JAX reference check (eval-mode dropout == identity).
    ref = jnp.maximum(x @ w1 + b1, 0.0) @ w2 + b2
    assert out.shape == (batch, target)
    assert jnp.allclose(out, ref, atol=1e-5, rtol=1e-5)

    # Also exercise the multi-tile grid path (>= 2 tiles, tail padding < 8 rows).
    big_b = 1100
    xb = jax.random.normal(kx, (big_b, dense1), jnp.float32)
    out_b = jax.block_until_ready(jax.jit(discri_forward)(xb, w1, b1, w2, b2))
    ref_b = jnp.maximum(xb @ w1 + b1, 0.0) @ w2 + b2
    assert out_b.shape == (big_b, target)
    assert jnp.allclose(out_b, ref_b, atol=1e-5, rtol=1e-5)

    print("KERNEL_OK")
</pallas_src>

<mosaic_0001>
module attributes {stable_mosaic.version = 11 : i64} {
  func.func @_discri_kernel(%arg0: i32, %arg1: memref<8x10xf32, #tpu.memory_space<vmem>>, %arg2: memref<10x10xf32, #tpu.memory_space<vmem>>, %arg3: memref<1x10xf32, #tpu.memory_space<vmem>>, %arg4: memref<10x2xf32, #tpu.memory_space<vmem>>, %arg5: memref<1x2xf32, #tpu.memory_space<vmem>>, %arg6: memref<8x2xf32, #tpu.memory_space<vmem>>) attributes {dimension_semantics = [#tpu.dimension_semantics<parallel>], iteration_bounds = array<i64: 1>, scalar_prefetch = 0 : i64, scratch_operands = 0 : i64, tpu.core_type = #tpu.core_type<tc>, window_params = [{transform_indices = @transform_0, window_bounds = array<i64: 8, 10>}, {pipeline_mode = #tpu.pipeline_mode<synchronous>, transform_indices = @transform_1, window_bounds = array<i64: 10, 10>}, {pipeline_mode = #tpu.pipeline_mode<synchronous>, transform_indices = @transform_2, window_bounds = array<i64: 1, 10>}, {pipeline_mode = #tpu.pipeline_mode<synchronous>, transform_indices = @transform_3, window_bounds = array<i64: 10, 2>}, {pipeline_mode = #tpu.pipeline_mode<synchronous>, transform_indices = @transform_4, window_bounds = array<i64: 1, 2>}, {transform_indices = @transform_5, window_bounds = array<i64: 8, 2>}]} {
    %c0 = arith.constant 0 : index
    %c0_0 = arith.constant 0 : index
    %0 = vector.load %arg1[%c0, %c0_0] : memref<8x10xf32, #tpu.memory_space<vmem>>, vector<8x10xf32>
    %c0_1 = arith.constant 0 : index
    %c0_2 = arith.constant 0 : index
    %1 = vector.load %arg2[%c0_1, %c0_2] : memref<10x10xf32, #tpu.memory_space<vmem>>, vector<10x10xf32>
    %cst = arith.constant dense<0.000000e+00> : vector<8x10xf32>
    %2 = tpu.matmul %0, %1, %cst {dimension_numbers = #tpu.dot_dimension_numbers<[1], [0], [0], [1], [0, 0, 1, 1], [], []>} : vector<8x10xf32>, vector<10x10xf32>, vector<8x10xf32> -> vector<8x10xf32>
    %c0_3 = arith.constant 0 : index
    %c0_4 = arith.constant 0 : index
    %3 = vector.load %arg3[%c0_3, %c0_4] : memref<1x10xf32, #tpu.memory_space<vmem>>, vector<1x10xf32>
    %4 = vector.broadcast %3 : vector<1x10xf32> to vector<8x10xf32>
    %5 = arith.addf %2, %4 : vector<8x10xf32>
    %cst_5 = arith.constant 0.000000e+00 : f32
    %6 = vector.broadcast %cst_5 : f32 to vector<8x10xf32>
    %7 = arith.maximumf %5, %6 : vector<8x10xf32>
    %c0_6 = arith.constant 0 : index
    %c0_7 = arith.constant 0 : index
    %8 = vector.load %arg4[%c0_6, %c0_7] : memref<10x2xf32, #tpu.memory_space<vmem>>, vector<10x2xf32>
    %cst_8 = arith.constant dense<0.000000e+00> : vector<8x2xf32>
    %9 = tpu.matmul %7, %8, %cst_8 {dimension_numbers = #tpu.dot_dimension_numbers<[1], [0], [0], [1], [0, 0, 1, 1], [], []>} : vector<8x10xf32>, vector<10x2xf32>, vector<8x2xf32> -> vector<8x2xf32>
    %c0_9 = arith.constant 0 : index
    %c0_10 = arith.constant 0 : index
    %10 = vector.load %arg5[%c0_9, %c0_10] : memref<1x2xf32, #tpu.memory_space<vmem>>, vector<1x2xf32>
    %11 = vector.broadcast %10 : vector<1x2xf32> to vector<8x2xf32>
    %12 = arith.addf %9, %11 : vector<8x2xf32>
    %c0_11 = arith.constant 0 : index
    %c0_12 = arith.constant 0 : index
    %13 = vector.load %arg6[%c0_11, %c0_12] : memref<8x2xf32, #tpu.memory_space<vmem>>, vector<8x2xf32>
    tpu.vector_store %arg6[%c0_11, %c0_12], %12 {strides = array<i32>} : memref<8x2xf32, #tpu.memory_space<vmem>>, vector<8x2xf32>,
    return
  }
  func.func @transform_0(%arg0: i32) -> (i32, i32) {
    %c0_i32 = arith.constant 0 : i32
    %c0_i32_0 = arith.constant 0 : i32
    return %arg0, %c0_i32 : i32, i32
  }
  func.func @transform_1(%arg0: i32) -> (i32, i32) {
    %c0_i32 = arith.constant 0 : i32
    %c0_i32_0 = arith.constant 0 : i32
    %c0_i32_1 = arith.constant 0 : i32
    return %c0_i32, %c0_i32_0 : i32, i32
  }
  func.func @transform_2(%arg0: i32) -> (i32, i32) {
    %c0_i32 = arith.constant 0 : i32
    %c0_i32_0 = arith.constant 0 : i32
    %c0_i32_1 = arith.constant 0 : i32
    return %c0_i32, %c0_i32_0 : i32, i32
  }
  func.func @transform_3(%arg0: i32) -> (i32, i32) {
    %c0_i32 = arith.constant 0 : i32
    %c0_i32_0 = arith.constant 0 : i32
    %c0_i32_1 = arith.constant 0 : i32
    return %c0_i32, %c0_i32_0 : i32, i32
  }
  func.func @transform_4(%arg0: i32) -> (i32, i32) {
    %c0_i32 = arith.constant 0 : i32
    %c0_i32_0 = arith.constant 0 : i32
    %c0_i32_1 = arith.constant 0 : i32
    return %c0_i32, %c0_i32_0 : i32, i32
  }
  func.func @transform_5(%arg0: i32) -> (i32, i32) {
    %c0_i32 = arith.constant 0 : i32
    %c0_i32_0 = arith.constant 0 : i32
    return %arg0, %c0_i32 : i32, i32
  }
}

</mosaic_0001>

<llo_original>
// kernel: discri_forward.1
$region0: #{discri_forward.1}
  #allocation0 [shape = 'u32[]', space=smem, size = 0x4, offset = 0x4, fixed_abs, tag = 'smem constant byte address 0x4 - core index']
  #allocation1 [shape = 'u32[144,128]{1,0:T(1,128)}', space=vmem, size = 0x12000, scoped, tag = 'internal scratch']
  %s0 = inlined_call_operand.hbm [shape: f32[8,10], index: 0, kind: input, shape index: {}]
  %s1 = inlined_call_operand.vmem [shape: f32[10,10], index: 1, kind: input, shape index: {}]
  %s2 = inlined_call_operand.vmem [shape: f32[1,10], index: 2, kind: input, shape index: {}]
  %s3 = inlined_call_operand.vmem [shape: f32[10,2], index: 3, kind: input, shape index: {}]
  %s4 = inlined_call_operand.vmem [shape: f32[1,2], index: 4, kind: input, shape index: {}]
  %s5 = inlined_call_operand.vmem [shape: f32[8,2], index: 5, kind: output, shape index: {}]
  %s6 = sld [smem:[#allocation0]]
  $region34: #{discri_forward.1} parent=0
    _
  %s8 = ssub.s32 1, %s6
  %s9 = scalar_select 0, %s8, %s6
  $region1: #{discri_forward.1} parent=0
    #allocation2 [shape = 'u8[4096]{0}', space=vmem, size = 0x1000, scoped, tag = 'input window, operand 0, single buffered']
    #allocation3 [shape = 's32[1]{0}', space=sflag, size = 0x4, scoped, tag = 'scoped memory for discri_forward.1']
    %10 = vsyncpa [#allocation3], 0
    // Predicated region
    $region2: #{discri_forward.1} parent=1 // pred_check
      _
    $region3: #{discri_forward.1} parent=1 // pred_check_branch
      %12 = sbr.rel (0) target = $region5
    $region4: #{discri_forward.1} parent=1 // pred_region
      %s14 = ssub.s32 128, 128
      %15 = vsyncadd [#allocation3], %s14
      %s17 = sshll.u32 [#allocation2], 4
      %s18 = int_to_ptr.vmem [resolvable:$true] %s17
      %20 = dma.hbm_to_vmem [thread:$0]  %s0, 128, %s18, [#allocation3]
    $region5: #{discri_forward.1} parent=1 // pred_fallthru
      _
    // Predicated region
    $region6: #{discri_forward.1} parent=1 // pred_check
      _
    $region7: #{discri_forward.1} parent=1 // pred_check_branch
      %22 = sbr.rel (0) target = $region9
    $region8: #{discri_forward.1} parent=1 // pred_region
      _
    $region9: #{discri_forward.1} parent=1 // pred_fallthru
      _
    // Predicated region
    $region10: #{discri_forward.1} parent=1 // pred_check
      _
    $region11: #{discri_forward.1} parent=1 // pred_check_branch
      %24 = sbr.rel (0) target = $region13
    $region12: #{discri_forward.1} parent=1 // pred_region
      _
    $region13: #{discri_forward.1} parent=1 // pred_fallthru
      _
    // Predicated region
    $region14: #{discri_forward.1} parent=1 // pred_check
      _
    $region15: #{discri_forward.1} parent=1 // pred_check_branch
      %26 = sbr.rel (0) target = $region17
    $region16: #{discri_forward.1} parent=1 // pred_region
      _
    $region17: #{discri_forward.1} parent=1 // pred_fallthru
      _
    // Predicated region
    $region18: #{discri_forward.1} parent=1 // pred_check
      _
    $region19: #{discri_forward.1} parent=1 // pred_check_branch
      %28 = sbr.rel (0) target = $region21
    $region20: #{discri_forward.1} parent=1 // pred_region
      _
    $region21: #{discri_forward.1} parent=1 // pred_fallthru
      _
    // Predicated region
    $region22: #{discri_forward.1} parent=1 // pred_check
      _
    $region23: #{discri_forward.1} parent=1 // pred_check_branch
      %30 = sbr.rel (0) target = $region25
    $region24: #{discri_forward.1} parent=1 // pred_region
      %31 = dma.done [#allocation3], 128
    $region25: #{discri_forward.1} parent=1 // pred_fallthru
      _
    %v32 = vld [vmem:[#allocation2] sm:$0xff]
    %v33 = vld [vmem:[%s1] sm:$0xff]
    %v34 = vld [vmem:[%s1 + $0x8] sm:$0x3]
    %v35 = vld [vmem:[%s2] sm:$0x1]
    %v37 = vlaneseq
    %v38 = vshrl.u32 %v37, 7
    %v39 = vsub.s32 0, %v38
    %v40 = vrot.slane %v35, %v39
    %vm42 = vcmask 80896
    %v44 = vsel %vm42, %v32, 0
    %vm46 = vcmask 1041408
    %v48 = vsel %vm46, %v34, 0
    %50 = vmatprep.subr.mxu0 0.0
    %51 = vmatpush1.msra.mxu0 0.0
    %52 = vmatprep.subr.mxu0 0.0
    %53 = vmatpush1.msra.mxu0 0.0
    %54 = vmatprep.subr.mxu0 0.0
    %55 = vmatpush1.msra.mxu0 0.0
    %56 = vmatprep.subr.mxu0 0.0
    %57 = vmatpush1.msra.mxu0 0.0
    %58 = vmatprep.subr.mxu0 0.0
    %59 = vmatpush1.msra.mxu0 0.0
    %60 = vmatprep.subr.mxu0 0.0
    %61 = vmatpush1.msra.mxu0 0.0
    %62 = vmatprep.subr.mxu0 0.0
    %63 = vmatpush1.msra.mxu0 0.0
    %64 = vmatprep.subr.mxu0 0.0
    %65 = vmatpush1.msra.mxu0 0.0
    %66 = vmatprep.subr.mxu0 0.0
    %67 = vmatpush1.msra.mxu0 0.0
    %68 = vmatprep.subr.mxu0 0.0
    %69 = vmatpush1.msra.mxu0 0.0
    %70 = vmatprep.subr.mxu0 0.0
    %71 = vmatpush1.msra.mxu0 0.0
    %72 = vmatprep.subr.mxu0 0.0
    %73 = vmatpush1.msra.mxu0 0.0
    %74 = vmatprep.subr.mxu0 0.0
    %75 = vmatpush1.msra.mxu0 0.0
    %76 = vmatprep.subr.mxu0 0.0
    %77 = vmatpush1.msra.mxu0 0.0
    %78 = vmatprep.subr.mxu0 0.0
    %79 = vmatpush1.msra.mxu0 %v48
    %80 = vmatprep.subr.mxu0 0.0
    %81 = vmatpush1.msra.mxu0 %v33
    %82 = vmatprep.subr.mxu0 0.0
    %83 = vmatpush2.msra.mxu0 0.0
    %84 = vmatprep.subr.mxu0 0.0
    %85 = vmatpush2.msra.mxu0 0.0
    %86 = vmatprep.subr.mxu0 0.0
    %87 = vmatpush2.msra.mxu0 0.0
    %88 = vmatprep.subr.mxu0 0.0
    %89 = vmatpush2.msra.mxu0 0.0
    %90 = vmatprep.subr.mxu0 0.0
    %91 = vmatpush2.msra.mxu0 0.0
    %92 = vmatprep.subr.mxu0 0.0
    %93 = vmatpush2.msra.mxu0 0.0
    %94 = vmatprep.subr.mxu0 0.0
    %95 = vmatpush2.msra.mxu0 0.0
    %96 = vmatprep.subr.mxu0 0.0
    %97 = vmatpush2.msra.mxu0 0.0
    %98 = vmatprep.subr.mxu0 0.0
    %99 = vmatpush2.msra.mxu0 0.0
    %100 = vmatprep.subr.mxu0 0.0
    %101 = vmatpush2.msra.mxu0 0.0
    %102 = vmatprep.subr.mxu0 0.0
    %103 = vmatpush2.msra.mxu0 0.0
    %104 = vmatprep.subr.mxu0 0.0
    %105 = vmatpush2.msra.mxu0 0.0
    %106 = vmatprep.subr.mxu0 0.0
    %107 = vmatpush2.msra.mxu0 0.0
    %108 = vmatprep.subr.mxu0 0.0
    %109 = vmatpush2.msra.mxu0 0.0
    %110 = vmatprep.subr.mxu0 0.0
    %111 = vmatpush2.msra.mxu0 0.0
    %112 = vmatprep.subr.mxu0 0.0
    %113 = vmatpush2.msra.mxu0 0.0
    %114 = vmatprep.mubr.f32.mxu0 0.0
    %115 = vmatmul.mubr.f32.gmra.mxu0 %v44
    %v116 = vpop.f32.mrf.mxu0
    %v117 = vadd.f32 %v40, %v116
    %v118 = vpop.f32.mrf.mxu0
    %119 = vdwg.mxu0
    %v120 = vmax.f32 %v117, 0.0
    %v121 = vld [vmem:[%s3] sm:$0xff]
    %v122 = vld [vmem:[%s3 + $0x8] sm:$0x3]
    %v123 = vld [vmem:[%s4] sm:$0x1]
    %v125 = vlaneseq
    %v126 = vshrl.u32 %v125, 7
    %v127 = vsub.s32 0, %v126
    %v128 = vrot.slane %v123, %v127
    %v131 = vsel %vm42, %v120, 0
    %v134 = vsel %vm46, %v122, 0
    %136 = vmatprep.subr.mxu0 0.0
    %137 = vmatpush1.msra.mxu0 0.0
    %138 = vmatprep.subr.mxu0 0.0
    %139 = vmatpush1.msra.mxu0 0.0
    %140 = vmatprep.subr.mxu0 0.0
    %141 = vmatpush1.msra.mxu0 0.0
    %142 = vmatprep.subr.mxu0 0.0
    %143 = vmatpush1.msra.mxu0 0.0
    %144 = vmatprep.subr.mxu0 0.0
    %145 = vmatpush1.msra.mxu0 0.0
    %146 = vmatprep.subr.mxu0 0.0
    %147 = vmatpush1.msra.mxu0 0.0
    %148 = vmatprep.subr.mxu0 0.0
    %149 = vmatpush1.msra.mxu0 0.0
    %150 = vmatprep.subr.mxu0 0.0
    %151 = vmatpush1.msra.mxu0 0.0
    %152 = vmatprep.subr.mxu0 0.0
    %153 = vmatpush1.msra.mxu0 0.0
    %154 = vmatprep.subr.mxu0 0.0
    %155 = vmatpush1.msra.mxu0 0.0
    %156 = vmatprep.subr.mxu0 0.0
    %157 = vmatpush1.msra.mxu0 0.0
    %158 = vmatprep.subr.mxu0 0.0
    %159 = vmatpush1.msra.mxu0 0.0
    %160 = vmatprep.subr.mxu0 0.0
    %161 = vmatpush1.msra.mxu0 0.0
    %162 = vmatprep.subr.mxu0 0.0
    %163 = vmatpush1.msra.mxu0 0.0
    %164 = vmatprep.subr.mxu0 0.0
    %165 = vmatpush1.msra.mxu0 %v134
    %166 = vmatprep.subr.mxu0 0.0
    %167 = vmatpush1.msra.mxu0 %v121
    %168 = vmatprep.subr.mxu0 0.0
    %169 = vmatpush2.msra.mxu0 0.0
    %170 = vmatprep.subr.mxu0 0.0
    %171 = vmatpush2.msra.mxu0 0.0
    %172 = vmatprep.subr.mxu0 0.0
    %173 = vmatpush2.msra.mxu0 0.0
    %174 = vmatprep.subr.mxu0 0.0
    %175 = vmatpush2.msra.mxu0 0.0
    %176 = vmatprep.subr.mxu0 0.0
    %177 = vmatpush2.msra.mxu0 0.0
    %178 = vmatprep.subr.mxu0 0.0
    %179 = vmatpush2.msra.mxu0 0.0
    %180 = vmatprep.subr.mxu0 0.0
    %181 = vmatpush2.msra.mxu0 0.0
    %182 = vmatprep.subr.mxu0 0.0
    %183 = vmatpush2.msra.mxu0 0.0
    %184 = vmatprep.subr.mxu0 0.0
    %185 = vmatpush2.msra.mxu0 0.0
    %186 = vmatprep.subr.mxu0 0.0
    %187 = vmatpush2.msra.mxu0 0.0
    %188 = vmatprep.subr.mxu0 0.0
    %189 = vmatpush2.msra.mxu0 0.0
    %190 = vmatprep.subr.mxu0 0.0
    %191 = vmatpush2.msra.mxu0 0.0
    %192 = vmatprep.subr.mxu0 0.0
    %193 = vmatpush2.msra.mxu0 0.0
    %194 = vmatprep.subr.mxu0 0.0
    %195 = vmatpush2.msra.mxu0 0.0
    %196 = vmatprep.subr.mxu0 0.0
    %197 = vmatpush2.msra.mxu0 0.0
    %198 = vmatprep.subr.mxu0 0.0
    %199 = vmatpush2.msra.mxu0 0.0
    %200 = vmatprep.mubr.f32.mxu0 0.0
    %201 = vmatmul.mubr.f32.gmra.mxu0 %v131
    %v202 = vpop.f32.mrf.mxu0
    %v203 = vadd.f32 %v128, %v202
    %v204 = vpop.f32.mrf.mxu0
    %205 = vdwg.mxu0
    %vm206 = vcmask 15360
    %207 = vst.msk [vmem:[%s5] sm:$0xff] %vm206, %v203
    // Predicated region
    $region26: #{discri_forward.1} parent=1 // pred_check
      _
    $region27: #{discri_forward.1} parent=1 // pred_check_branch
      %209 = sbr.rel (0) target = $region29
    $region28: #{discri_forward.1} parent=1 // pred_region
      _
    $region29: #{discri_forward.1} parent=1 // pred_fallthru
      _
    // Predicated region
    $region30: #{discri_forward.1} parent=1 // pred_check
      _
    $region31: #{discri_forward.1} parent=1 // pred_check_branch
      %211 = sbr.rel (0) target = $region33
    $region32: #{discri_forward.1} parent=1 // pred_region
      _
    $region33: #{discri_forward.1} parent=1 // pred_fallthru
      _
    %212 = vsyncpa [#allocation3], 1

</llo_original>
